<compile_context>
chip_gen: v7x
topology: tpu7x:2x2x1
jax: 0.10.0
libtpu: 0.0.40
codegen_flags: <defaults>
</compile_context>

<pallas_src>
import functools

import jax
import jax.numpy as jnp
from jax.experimental import pallas as pl
from jax.experimental.pallas import tpu as pltpu


_ACTIVATIONS = {
    "relu": lambda x: jnp.maximum(x, 0.0),
    "sigmoid": jax.nn.sigmoid,
    "tanh": jnp.tanh,
    "leaky_relu": lambda x: jax.nn.leaky_relu(x, negative_slope=0.01),
    "elu": jax.nn.elu,
    "gelu": lambda x: jax.nn.gelu(x, approximate=False),
}

_MIN_ROWS_FULL_WIDTH = 512  # rows we insist on before tiling the feature axis


def _neuron_kernel(x_ref, w_ref, b_ref, o_ref, acc_ref, *, activation):
    # x_ref : (TB, TK) streamed tile, w_ref : (1, TK) resident weight slice,
    # b_ref : (1, 1) SMEM scalar, o_ref : (TB, 1), acc_ref : (TB, 1) f32 scratch.
    k = pl.program_id(1)

    @pl.when(k == 0)
    def _():
        acc_ref[...] = jnp.zeros_like(acc_ref)

    x = x_ref[...]
    if x.dtype != jnp.float32:
        x = x.astype(jnp.float32)              # bf16 storage, f32 math (needed on v5e)
    # VPU multiply + XLU lane reduce; exact f32 per feature tile.
    acc_ref[...] += jnp.sum(x * w_ref[...], axis=-1, keepdims=True)

    @pl.when(k == pl.num_programs(1) - 1)
    def _():
        out = acc_ref[...] + b_ref[0, 0]
        act = _ACTIVATIONS.get(activation, _ACTIVATIONS["relu"])
        o_ref[...] = act(out)


def _round_up(n, m):
    return ((n + m - 1) // m) * m


def _vmem_policy():
    """Returns (per-x-buffer byte budget, vmem_limit_bytes, min batch grid steps)."""
    try:
        cap = pltpu.get_tpu_info().vmem_capacity_bytes
    except Exception:
        cap = None
    if cap is not None and cap >= 96 * 1024 * 1024:
        # v5e / v6e: 128 MiB physical VMEM -> big tiles, high limit.
        return 44 * 1024 * 1024, 100 * 1024 * 1024, 2
    # v7x (64 MiB per TC) or unknown: conservative budget; >=4 steps so the
    # "parallel" batch axis can keep both TensorCores busy.
    return 22 * 1024 * 1024, 48 * 1024 * 1024, 4


def _choose_tiles(B, input_size, itemsize, budget, min_steps, block_rows):
    """Pick (TB, TK): batch-tile rows and feature-tile width."""
    row_bytes = input_size * itemsize
    if _MIN_ROWS_FULL_WIDTH * row_bytes <= budget or input_size <= 128:
        tk = input_size
    else:
        # Very wide rows: tile the feature axis with the largest multiple-of-128
        # divisor that keeps >= _MIN_ROWS_FULL_WIDTH rows per streamed tile.
        max_k = max(128, (budget // (_MIN_ROWS_FULL_WIDTH * itemsize)) // 128 * 128)
        start = min(max_k, (input_size // 128) * 128)
        tk = 0
        for cand in range(start, 0, -128):
            if input_size % cand == 0:
                tk = cand
                break
        if tk == 0:
            # TODO(synk): no multiple-of-128 divisor of input_size; fall back to
            # full width (may hit the VMEM limit at compile time for pathological
            # widths — fails loudly, never silently).
            tk = input_size

    tb_max = max(8, (budget // (tk * itemsize)) // 8 * 8)
    tb = min(tb_max, _round_up(B, 8))
    if block_rows is not None:
        tb = min(tb, max(8, _round_up(block_rows, 8)))
    # Keep at least `min_steps` batch grid steps (when B allows it) so the
    # parallel axis can shard across TCs and prefetch overlaps compute.
    if B >= min_steps * 8:
        tb = min(tb, max(8, (B // min_steps) // 8 * 8))
    return tb, tk


def practical_multi_weight_neuron(x, color_w, bright_w, bias=None, *,
                                  activation="relu", block_rows=None,
                                  _budget_bytes=None):
    """x: (B, input_size) f32 or bf16 (bf16 halves HBM traffic; math is f32).

    Returns (B,) f32 — matches the torch module's 2-D forward output.
    """
    B, input_size = x.shape
    F = input_size // 2

    # Concatenated weight row (1, 2F): kills in-kernel half-slices of the x tile.
    w = jnp.concatenate(
        [color_w.reshape(F).astype(jnp.float32),
         bright_w.reshape(F).astype(jnp.float32)]
    ).reshape(1, input_size)
    if bias is None:
        bias = jnp.zeros((1,), jnp.float32)
    b = bias.astype(jnp.float32).reshape(1, 1)

    budget, vmem_limit, min_steps = _vmem_policy()
    if _budget_bytes is not None:        # test hook: force the feature-tiled path
        budget = _budget_bytes
    itemsize = jnp.dtype(x.dtype).itemsize
    TB, TK = _choose_tiles(B, input_size, itemsize, budget, min_steps, block_rows)

    # No jnp.pad: Pallas masks the partial last batch block; its stale rows only
    # produce output rows beyond B that the (B, 1) out_shape never materializes.
    n_b = pl.cdiv(B, TB)
    n_k = pl.cdiv(input_size, TK)

    kernel = functools.partial(_neuron_kernel, activation=activation)
    out = pl.pallas_call(
        kernel,
        out_shape=jax.ShapeDtypeStruct((B, 1), jnp.float32),
        grid_spec=pltpu.PrefetchScalarGridSpec(
            num_scalar_prefetch=0,
            grid=(n_b, n_k),
            in_specs=[
                pl.BlockSpec((TB, TK), lambda i, k: (i, k)),        # stream x tiles
                pl.BlockSpec((1, TK), lambda i, k: (0, k)),         # tiny weight slice
                pl.BlockSpec(memory_space=pltpu.MemorySpace.SMEM),  # bias scalar (1,1)
            ],
            out_specs=pl.BlockSpec((TB, 1), lambda i, k: (i, 0)),
            scratch_shapes=[pltpu.VMEM((TB, 1), jnp.float32)],      # per-row accumulator
        ),
        compiler_params=pltpu.CompilerParams(
            dimension_semantics=("parallel", "arbitrary"),
            vmem_limit_bytes=vmem_limit,
        ),
    )(x, w, b)
    return out[:, 0]


if __name__ == "__main__":
    key = jax.random.PRNGKey(0)
    k_x, k_cw, k_bw = jax.random.split(key, 3)

    B, input_size = 8, 256                  # small, (8,128)-friendly shapes
    F = input_size // 2

    # Deterministic synthetic parameters (same shapes as the nn.Module):
    #   color_weights (F,), brightness_weights (F,), bias (1,)
    x = jax.random.normal(k_x, (B, input_size), dtype=jnp.float32)
    color_w = jax.random.normal(k_cw, (F,), dtype=jnp.float32) * 0.01
    bright_w = jax.random.normal(k_bw, (F,), dtype=jnp.float32) * 0.01
    bias = jnp.zeros((1,), dtype=jnp.float32)

    out = practical_multi_weight_neuron(x, color_w, bright_w, bias)
    out = jax.block_until_ready(out)

    # Pure-JAX reference of the PyTorch forward (2-D path).
    ref = jnp.maximum(x[:, :F] @ color_w + x[:, F:] @ bright_w + bias[0], 0.0)
    assert out.shape == (B,), out.shape
    assert jnp.allclose(out, ref, atol=1e-5, rtol=1e-5), (out, ref)

    # Check 2: multi-tile batch grid, batch not divisible by the tile
    # (exercises the un-padded partial last block + parallel batch axis).
    B2 = 200
    x2 = jax.random.normal(jax.random.PRNGKey(1), (B2, input_size), dtype=jnp.float32)
    out2 = jax.block_until_ready(
        practical_multi_weight_neuron(x2, color_w, bright_w, bias, block_rows=64))
    ref2 = jnp.maximum(x2[:, :F] @ color_w + x2[:, F:] @ bright_w + bias[0], 0.0)
    assert out2.shape == (B2,), out2.shape
    assert jnp.allclose(out2, ref2, atol=1e-5, rtol=1e-5), (out2, ref2)

    # Check 3: force the feature-tiled accumulator path (2-D grid, TK=128, NK=2)
    # via the test-only budget hook.
    out3 = jax.block_until_ready(
        practical_multi_weight_neuron(x2, color_w, bright_w, bias,
                                      _budget_bytes=64 * 1024))
    assert out3.shape == (B2,), out3.shape
    assert jnp.allclose(out3, ref2, atol=1e-5, rtol=1e-5), (out3, ref2)

    print("KERNEL_OK")
</pallas_src>

<mosaic_0001>
module attributes {stable_mosaic.version = 11 : i64} {
  func.func @_neuron_kernel(%arg0: i32, %arg1: i32, %arg2: memref<8x256xf32, #tpu.memory_space<vmem>>, %arg3: memref<1x256xf32, #tpu.memory_space<vmem>>, %arg4: memref<1x1xf32, #tpu.memory_space<smem>>, %arg5: memref<8x1xf32, #tpu.memory_space<vmem>>, %arg6: memref<8x1xf32, #tpu.memory_space<vmem>>) attributes {dimension_semantics = [#tpu.dimension_semantics<parallel>, #tpu.dimension_semantics<arbitrary>], iteration_bounds = array<i64: 1, 1>, scalar_prefetch = 0 : i64, scratch_operands = 1 : i64, tpu.core_type = #tpu.core_type<tc>, window_params = [{transform_indices = @transform_0, window_bounds = array<i64: 8, 256>}, {transform_indices = @transform_1, window_bounds = array<i64: 1, 256>}, {transform_indices = @transform_2, window_bounds = array<i64: 1, 1>}, {transform_indices = @transform_3, window_bounds = array<i64: 8, 1>}]} {
    %c0_i32 = arith.constant 0 : i32
    %0 = arith.cmpi eq, %arg1, %c0_i32 : i32
    %1 = arith.extui %0 : i1 to i32
    %c0_i32_0 = arith.constant 0 : i32
    %2 = arith.cmpi ne, %1, %c0_i32_0 : i32
    scf.if %2 {
      %cst_10 = arith.constant 0.000000e+00 : f32
      %15 = vector.broadcast %cst_10 : f32 to vector<8x1xf32>
      %c0_11 = arith.constant 0 : index
      %c0_12 = arith.constant 0 : index
      %16 = vector.load %arg6[%c0_11, %c0_12] : memref<8x1xf32, #tpu.memory_space<vmem>>, vector<8x1xf32>
      tpu.vector_store %arg6[%c0_11, %c0_12], %15 {strides = array<i32>} : memref<8x1xf32, #tpu.memory_space<vmem>>, vector<8x1xf32>,
    } else {
    }
    %c0 = arith.constant 0 : index
    %c0_1 = arith.constant 0 : index
    %3 = vector.load %arg2[%c0, %c0_1] : memref<8x256xf32, #tpu.memory_space<vmem>>, vector<8x256xf32>
    %c0_2 = arith.constant 0 : index
    %c0_3 = arith.constant 0 : index
    %4 = vector.load %arg6[%c0_2, %c0_3] : memref<8x1xf32, #tpu.memory_space<vmem>>, vector<8x1xf32>
    %c0_4 = arith.constant 0 : index
    %c0_5 = arith.constant 0 : index
    %5 = vector.load %arg3[%c0_4, %c0_5] : memref<1x256xf32, #tpu.memory_space<vmem>>, vector<1x256xf32>
    %6 = vector.broadcast %5 : vector<1x256xf32> to vector<8x256xf32>
    %7 = arith.mulf %3, %6 : vector<8x256xf32>
    %cst = arith.constant dense<0.000000e+00> : vector<8xf32>
    %8 = vector.multi_reduction <add>, %7, %cst [1] : vector<8x256xf32> to vector<8xf32>
    %9 = vector.shape_cast %8 : vector<8xf32> to vector<8x1xf32>
    %10 = arith.addf %4, %9 : vector<8x1xf32>
    %c0_6 = arith.constant 0 : index
    %c0_7 = arith.constant 0 : index
    %11 = vector.load %arg6[%c0_6, %c0_7] : memref<8x1xf32, #tpu.memory_space<vmem>>, vector<8x1xf32>
    tpu.vector_store %arg6[%c0_6, %c0_7], %10 {strides = array<i32>} : memref<8x1xf32, #tpu.memory_space<vmem>>, vector<8x1xf32>,
    %c0_i32_8 = arith.constant 0 : i32
    %12 = arith.cmpi eq, %arg1, %c0_i32_8 : i32
    %13 = arith.extui %12 : i1 to i32
    %c0_i32_9 = arith.constant 0 : i32
    %14 = arith.cmpi ne, %13, %c0_i32_9 : i32
    scf.if %14 {
      %c0_10 = arith.constant 0 : index
      %c0_11 = arith.constant 0 : index
      %15 = vector.load %arg6[%c0_10, %c0_11] : memref<8x1xf32, #tpu.memory_space<vmem>>, vector<8x1xf32>
      %c0_12 = arith.constant 0 : index
      %c0_13 = arith.constant 0 : index
      %16 = memref.load %arg4[%c0_12, %c0_13] : memref<1x1xf32, #tpu.memory_space<smem>>
      %17 = vector.broadcast %16 : f32 to vector<8x1xf32>
      %18 = arith.addf %15, %17 : vector<8x1xf32>
      %cst_14 = arith.constant 0.000000e+00 : f32
      %19 = vector.broadcast %cst_14 : f32 to vector<8x1xf32>
      %20 = arith.maximumf %18, %19 : vector<8x1xf32>
      %c0_15 = arith.constant 0 : index
      %c0_16 = arith.constant 0 : index
      %21 = vector.load %arg5[%c0_15, %c0_16] : memref<8x1xf32, #tpu.memory_space<vmem>>, vector<8x1xf32>
      tpu.vector_store %arg5[%c0_15, %c0_16], %20 {strides = array<i32>} : memref<8x1xf32, #tpu.memory_space<vmem>>, vector<8x1xf32>,
    } else {
    }
    return
  }
  func.func @transform_0(%arg0: i32, %arg1: i32) -> (i32, i32) {
    %c0_i32 = arith.constant 0 : i32
    return %arg0, %arg1 : i32, i32
  }
  func.func @transform_1(%arg0: i32, %arg1: i32) -> (i32, i32) {
    %c0_i32 = arith.constant 0 : i32
    %c0_i32_0 = arith.constant 0 : i32
    return %c0_i32, %arg1 : i32, i32
  }
  func.func @transform_2(%arg0: i32, %arg1: i32) -> (i32, i32) {
    %c0_i32 = arith.constant 0 : i32
    %c0_i32_0 = arith.constant 0 : i32
    %c0_i32_1 = arith.constant 0 : i32
    return %c0_i32, %c0_i32_0 : i32, i32
  }
  func.func @transform_3(%arg0: i32, %arg1: i32) -> (i32, i32) {
    %c0_i32 = arith.constant 0 : i32
    %c0_i32_0 = arith.constant 0 : i32
    return %arg0, %c0_i32 : i32, i32
  }
}

</mosaic_0001>

<llo_original>
// kernel: tpu_custom_call.1
$region0: #{tpu_custom_call.1}
  #allocation0 [shape = 'u32[]', space=smem, size = 0x4, offset = 0x4, fixed_abs, tag = 'smem constant byte address 0x4 - core index']
  #allocation1 [shape = 'u32[144,128]{1,0:T(1,128)}', space=vmem, size = 0x12000, scoped, tag = 'internal scratch']
  #allocation2 [shape = 'f32[8,1]{1,0:T(8,128)}', space=vmem, size = 0x1000, scoped, tag = 'scratch operand']
  #allocation3 [shape = 'f32[1,1]{1,0:T(1,128)S(6)}', space=smem, size = 0x200, scoped, tag = 'scoped memory for tpu_custom_call.1']
  %s0 = inlined_call_operand.hbm [shape: f32[8,256], index: 0, kind: input, shape index: {}]
  %s1 = inlined_call_operand.vmem [shape: f32[1,256], index: 1, kind: input, shape index: {}]
  %s2 = inlined_call_operand.<no memory space> [shape: f32[1,1], index: 2, kind: input, shape index: {}]
  %s3 = inlined_call_operand.vmem [shape: f32[8,1], index: 3, kind: output, shape index: {}]
  %s4 = sld [smem:[#allocation0]]
  $region34: #{tpu_custom_call.1} parent=0
    _
  %s6 = ssub.s32 1, %s4
  %s7 = scalar_select 0, %s6, %s4
  %8 = sst [smem:[#allocation3]] %s2
  $region1: #{tpu_custom_call.1} parent=0
    #allocation4 [shape = 'u8[8192]{0}', space=vmem, size = 0x2000, scoped, tag = 'input window, operand 0, single buffered']
    #allocation5 [shape = 's32[1]{0}', space=sflag, size = 0x4, scoped, tag = 'scoped memory for tpu_custom_call.1']
    %9 = vsyncpa [#allocation5], 0
    // Predicated region
    $region2: #{tpu_custom_call.1} parent=1 // pred_check
      _
    $region3: #{tpu_custom_call.1} parent=1 // pred_check_branch
      %11 = sbr.rel (0) target = $region5
    $region4: #{tpu_custom_call.1} parent=1 // pred_region
      %s13 = ssub.s32 256, 256
      %14 = vsyncadd [#allocation5], %s13
      %s16 = sshll.u32 [#allocation4], 4
      %s17 = int_to_ptr.vmem [resolvable:$true] %s16
      %19 = dma.hbm_to_vmem [thread:$0]  %s0, 256, %s17, [#allocation5]
    $region5: #{tpu_custom_call.1} parent=1 // pred_fallthru
      _
    // Predicated region
    $region6: #{tpu_custom_call.1} parent=1 // pred_check
      _
    $region7: #{tpu_custom_call.1} parent=1 // pred_check_branch
      %21 = sbr.rel (0) target = $region9
    $region8: #{tpu_custom_call.1} parent=1 // pred_region
      _
    $region9: #{tpu_custom_call.1} parent=1 // pred_fallthru
      _
    // Predicated region
    $region10: #{tpu_custom_call.1} parent=1 // pred_check
      _
    $region11: #{tpu_custom_call.1} parent=1 // pred_check_branch
      %23 = sbr.rel (0) target = $region13
    $region12: #{tpu_custom_call.1} parent=1 // pred_region
      _
    $region13: #{tpu_custom_call.1} parent=1 // pred_fallthru
      _
    // Predicated region
    $region14: #{tpu_custom_call.1} parent=1 // pred_check
      _
    $region15: #{tpu_custom_call.1} parent=1 // pred_check_branch
      %25 = sbr.rel (0) target = $region17
    $region16: #{tpu_custom_call.1} parent=1 // pred_region
      %26 = dma.done [#allocation5], 256
    $region17: #{tpu_custom_call.1} parent=1 // pred_fallthru
      _
    %p27 = scmp.eq.s32.totalorder 0, 0
    // Predicated region
    $region18: #{tpu_custom_call.1} parent=1 // pred_check
      %p28 = pneg %p27
    $region19: #{tpu_custom_call.1} parent=1 // pred_check_branch
      %30 = sbr.rel (%p28) target = $region21
    $region20: #{tpu_custom_call.1} parent=1 // pred_region
      %vm31 = vcmask 7168
      %32 = vst.msk [vmem:[#allocation2] sm:$0xff] %vm31, 0.0
    $region21: #{tpu_custom_call.1} parent=1 // pred_fallthru
      _
    %v33 = vld [vmem:[#allocation4] sm:$0xff]
    %v34 = vld [vmem:[#allocation4 + $0x8] sm:$0xff]
    %v35 = vld [vmem:[#allocation2] sm:$0xff]
    %v36 = vld [vmem:[%s1] sm:$0x3]
    %v38 = vlaneseq
    %v39 = vshrl.u32 %v38, 7
    %v40 = vsub.s32 0, %v39
    %v41 = vrot.slane %v36, %v40
    %v42 = vlaneseq
    %v43 = vshrl.u32 %v42, 7
    %v44 = vsub.s32 1, %v43
    %v45 = vrot.slane %v36, %v44
    %v48 = vmul.f32 %v33, %v41
    %v49 = vmul.f32 %v34, %v45
    %v50 = vadd.f32 %v48, %v49
    %51 = vadd.xlane.f32.xlu0 %v50
    %v52 = vpop.xlane.xlu0 %51
    %v53 = vadd.f32 %v35, %v52
    %vm54 = vcmask 7168
    %55 = vst.msk [vmem:[#allocation2] sm:$0xff] %vm54, %v53
    // Predicated region
    $region22: #{tpu_custom_call.1} parent=1 // pred_check
      %p56 = pneg %p27
    $region23: #{tpu_custom_call.1} parent=1 // pred_check_branch
      %58 = sbr.rel (%p56) target = $region25
    $region24: #{tpu_custom_call.1} parent=1 // pred_region
      %v59 = vld [vmem:[#allocation2] sm:$0xff]
      %s60 = sld [smem:[#allocation3]]
      %v61 = vstv %s60
      %v62 = vadd.f32 %v59, %v61
      %v63 = vmax.f32 %v62, 0.0
      %64 = vst.msk [vmem:[%s3] sm:$0xff] %vm54, %v63
    $region25: #{tpu_custom_call.1} parent=1 // pred_fallthru
      _
    // Predicated region
    $region26: #{tpu_custom_call.1} parent=1 // pred_check
      _
    $region27: #{tpu_custom_call.1} parent=1 // pred_check_branch
      %66 = sbr.rel (0) target = $region29
    $region28: #{tpu_custom_call.1} parent=1 // pred_region
      _
    $region29: #{tpu_custom_call.1} parent=1 // pred_fallthru
      _
    // Predicated region
    $region30: #{tpu_custom_call.1} parent=1 // pred_check
      _
    $region31: #{tpu_custom_call.1} parent=1 // pred_check_branch
      %68 = sbr.rel (0) target = $region33
    $region32: #{tpu_custom_call.1} parent=1 // pred_region
      _
    $region33: #{tpu_custom_call.1} parent=1 // pred_fallthru
      _
    %69 = vsyncpa [#allocation5], 1

</llo_original>
